<compile_context>
chip_gen: v7x
topology: tpu7x:2x2x1
jax: 0.10.0
libtpu: 0.0.40
codegen_flags: <defaults>
</compile_context>

<pallas_src>
import jax
import jax.numpy as jnp
from jax.experimental import pallas as pl
from jax.experimental.pallas import tpu as pltpu

OUT_H = 28
OUT_W = 28
P = OUT_H * OUT_W      # 784
P_PAD = 896            # 7 * 128 : lane-dense padding of the 784 axis


def _bilinear_matrix(out_size, in_size, dtype=jnp.float32):
    """Resize matrix R (out_size, in_size) for bilinear, align_corners=True
    (semantics of torch.nn.UpsamplingBilinear2d)."""
    if in_size == 1:
        return jnp.ones((out_size, 1), dtype)
    scale = (in_size - 1) / (out_size - 1)
    src = jnp.arange(out_size, dtype=jnp.float32) * scale
    lo = jnp.clip(jnp.floor(src).astype(jnp.int32), 0, in_size - 2)
    hi = lo + 1
    w_hi = src - lo.astype(jnp.float32)
    w_lo = 1.0 - w_hi
    rows = jnp.arange(out_size)
    m = jnp.zeros((out_size, in_size), dtype)
    m = m.at[rows, lo].add(w_lo.astype(dtype))
    m = m.at[rows, hi].add(w_hi.astype(dtype))
    return m


def _corr_kernel(f2_ref, f1_ref, r1_ref, out_ref):
    # f2_ref : (1, K_BLK, C)      selected feature2 vectors for this (b, k) block
    # f1_ref : (1, C, H1*W1)      RAW feature1 (flattened spatial), this batch b
    # r1_ref : (H1*W1, P_PAD)     combined bilinear resize matrix (zero-padded lanes)
    # out_ref: (1, K_BLK, P_PAD)  normalized correlation maps
    f2 = f2_ref[0]                                                   # (K_BLK, C)
    f1 = f1_ref[0]                                                   # (C, HW)
    # Channel contraction first (valid by linearity; ReLU comes after the
    # full linear chain).
    g = jnp.dot(f2, f1, preferred_element_type=jnp.float32)          # (K_BLK, HW)  MXU
    # Fused bilinear resize: one dense matmul with the kron(Rh,Rw) matrix.
    corr = jnp.dot(g.astype(r1_ref.dtype), r1_ref[...],
                   preferred_element_type=jnp.float32)               # (K_BLK, P_PAD)
    corr = jnp.maximum(corr, 0.0)                                    # ReLU (VPU)
    # Padding lanes hold corr == 0.0 exactly (zero resize columns), so each
    # contributes exp(0) = 1 to the raw sum; subtract that constant.
    denom = jnp.sum(jnp.exp(corr), axis=1, keepdims=True) - float(P_PAD - P)
    inv = pl.reciprocal(denom, approx=True) * 10.0                   # EUP; *10 folded in
    out_ref[0] = corr * inv


def correlation_map_layer(feature1, feature2, knn_inds, *, matmul_dtype=jnp.float32):
    """feature1/feature2: (B, C, H, W) float; knn_inds: (K, 2) int (x=col, y=row)
    on the 28x28 resized grid. Returns (B, K, 28, 28) float32."""
    B, C, H1, W1 = feature1.shape
    _, C2, H2, W2 = feature2.shape
    assert C2 == C
    f32 = jnp.float32

    # Bilinear resize matrices (align_corners=True).
    Rh1 = _bilinear_matrix(OUT_H, H1)            # (28, H1)
    Rw1 = _bilinear_matrix(OUT_W, W1)            # (28, W1)
    Rh2 = _bilinear_matrix(OUT_H, H2)            # (28, H2)
    Rw2 = _bilinear_matrix(OUT_W, W2)            # (28, W2)

    # ---- feature2 side: resize + knn gather fused into one tiny einsum.
    # Selecting point (ky, kx) of the resized map == contracting with the
    # (ky)-th / (kx)-th rows of the separable resize matrices.
    ky = knn_inds[:, 1].astype(jnp.int32)        # row (h) index
    kx = knn_inds[:, 0].astype(jnp.int32)        # col (w) index
    Rh2_sel = Rh2[ky]                            # (K, H2)
    Rw2_sel = Rw2[kx]                            # (K, W2)
    f2_sel = jnp.einsum('kh,bchw,kw->bkc', Rh2_sel,
                        feature2.astype(f32), Rw2_sel)          # (B, K, C), tiny

    K = int(knn_inds.shape[0])

    # Pad K to a sublane multiple of 8 (and to a multiple of the K block).
    K_pad = ((K + 7) // 8) * 8
    if K_pad > 128:
        K_BLK = 128
        K_pad = ((K_pad + 127) // 128) * 128
    else:
        K_BLK = K_pad
    f2_sel = f2_sel.astype(matmul_dtype)
    if K_pad != K:
        f2_sel = jnp.pad(f2_sel, ((0, 0), (0, K_pad - K), (0, 0)))

    # ---- feature1 side: pass RAW feature1; resize happens inside the kernel.
    HW = H1 * W1
    f1_flat = feature1.astype(matmul_dtype).reshape(B, C, HW)   # (B, C, HW)

    # Combined resize matrix: R1[h1*W1+w1, h*28+w] = Rh1[h,h1] * Rw1[w,w1],
    # lane-padded with zero columns from 784 -> 896.
    R1 = jnp.einsum('oh,pw->hwop', Rh1, Rw1).reshape(HW, P)
    R1 = jnp.pad(R1, ((0, 0), (0, P_PAD - P))).astype(matmul_dtype)
    # NOTE: R1 lives in VMEM (double-buffered) per grid step; for very large raw
    # feature maps (HW >> 784) raise vmem_limit_bytes or tile the HW axis.

    n_kb = K_pad // K_BLK
    isz = jnp.dtype(matmul_dtype).itemsize
    cost = pl.CostEstimate(
        flops=int(2 * B * K_pad * C * HW + 2 * B * K_pad * HW * P_PAD),
        transcendentals=int(B * K_pad * (P_PAD + 1)),
        bytes_accessed=int(isz * (B * K_pad * C
                                  + B * n_kb * C * HW
                                  + B * n_kb * HW * P_PAD)
                           + 4 * B * K_pad * P_PAD),
    )

    out = pl.pallas_call(
        _corr_kernel,
        out_shape=jax.ShapeDtypeStruct((B, K_pad, P_PAD), jnp.float32),
        grid_spec=pltpu.PrefetchScalarGridSpec(
            num_scalar_prefetch=0,
            grid=(B, n_kb),
            in_specs=[
                pl.BlockSpec((1, K_BLK, C), lambda b, k: (b, k, 0)),
                pl.BlockSpec((1, C, HW), lambda b, k: (b, 0, 0)),
                pl.BlockSpec((HW, P_PAD), lambda b, k: (0, 0)),
            ],
            out_specs=pl.BlockSpec((1, K_BLK, P_PAD), lambda b, k: (b, k, 0)),
        ),
        compiler_params=pltpu.CompilerParams(
            dimension_semantics=("parallel", "parallel")),
        cost_estimate=cost,
    )(f2_sel, f1_flat, R1)

    # Strip K / lane padding and reshape to the PyTorch output layout.
    return out[:, :K, :P].reshape(B, K, OUT_H, OUT_W)


def _reference(feature1, feature2, knn_inds):
    """Pure-JAX float32 mirror of the PyTorch forward, for correctness checking."""
    B, C, H1, W1 = feature1.shape
    _, _, H2, W2 = feature2.shape
    Rh1, Rw1 = _bilinear_matrix(OUT_H, H1), _bilinear_matrix(OUT_W, W1)
    Rh2, Rw2 = _bilinear_matrix(OUT_H, H2), _bilinear_matrix(OUT_W, W2)
    f1 = jnp.einsum('oh,bchw,pw->bcop', Rh1, feature1.astype(jnp.float32), Rw1)
    f2 = jnp.einsum('oh,bchw,pw->bcop', Rh2, feature2.astype(jnp.float32), Rw2)
    f1 = f1.reshape(B, C, P)                 # (B, C, 784)
    f2 = f2.reshape(B, C, P)                 # (B, C, 784)
    corr = jnp.einsum('bcp,bcq->pbq', f2, f1)
    corr = jax.nn.relu(corr)                 # (784, B, 784)
    p_idx = knn_inds[:, 1].astype(jnp.int32) * OUT_W + knn_inds[:, 0].astype(jnp.int32)
    corr = corr[p_idx]                       # (K, B, 784)
    denom = jnp.sum(jnp.exp(corr), axis=2, keepdims=True)   # (K, B, 1)
    corr = corr / denom * 10.0
    corr = jnp.transpose(corr, (1, 0, 2))    # (B, K, 784)
    return corr.reshape(B, -1, OUT_H, OUT_W)


if __name__ == "__main__":
    key = jax.random.PRNGKey(0)
    k1, k2, k3 = jax.random.split(key, 3)
    B, C, H, W, K = 2, 4, 16, 16, 8
    feature1 = jax.random.normal(k1, (B, C, H, W), dtype=jnp.float32)
    feature2 = jax.random.normal(k2, (B, C, H, W), dtype=jnp.float32)
    knn_inds = jax.random.randint(k3, (K, 2), 0, 28, dtype=jnp.int32)

    ref = _reference(feature1, feature2, knn_inds)

    # float32 matmul-input path (default): tight tolerance vs. PyTorch-order reference.
    out = jax.block_until_ready(correlation_map_layer(feature1, feature2, knn_inds))
    assert out.shape == (B, K, OUT_H, OUT_W), out.shape
    assert bool(jnp.allclose(out, ref, rtol=1e-2, atol=1e-3)), "f32 mismatch vs reference"

    # bfloat16 matmul-input path (halves HBM->VMEM DMA on v6e/v7x); looser tolerance.
    out_bf16 = jax.block_until_ready(
        correlation_map_layer(feature1, feature2, knn_inds, matmul_dtype=jnp.bfloat16))
    assert bool(jnp.allclose(out_bf16, ref, rtol=5e-2, atol=5e-3)), "bf16 mismatch vs reference"

    print("KERNEL_OK")
</pallas_src>

<mosaic_0001>
module attributes {stable_mosaic.version = 11 : i64} {
  func.func @_corr_kernel(%arg0: i32, %arg1: i32, %arg2: memref<1x8x4xf32, #tpu.memory_space<vmem>>, %arg3: memref<1x4x256xf32, #tpu.memory_space<vmem>>, %arg4: memref<256x896xf32, #tpu.memory_space<vmem>>, %arg5: memref<1x8x896xf32, #tpu.memory_space<vmem>>) attributes {dimension_semantics = [#tpu.dimension_semantics<parallel>, #tpu.dimension_semantics<parallel>], iteration_bounds = array<i64: 2, 1>, scalar_prefetch = 0 : i64, scratch_operands = 0 : i64, tpu.core_type = #tpu.core_type<tc>, window_params = [{transform_indices = @transform_0, window_bounds = array<i64: 1, 8, 4>}, {transform_indices = @transform_1, window_bounds = array<i64: 1, 4, 256>}, {pipeline_mode = #tpu.pipeline_mode<synchronous>, transform_indices = @transform_2, window_bounds = array<i64: 256, 896>}, {transform_indices = @transform_3, window_bounds = array<i64: 1, 8, 896>}]} {
    %c0 = arith.constant 0 : index
    %c0_0 = arith.constant 0 : index
    %c0_1 = arith.constant 0 : index
    %0 = vector.load %arg2[%c0, %c0_0, %c0_1] : memref<1x8x4xf32, #tpu.memory_space<vmem>>, vector<1x8x4xf32>
    %1 = vector.shape_cast %0 : vector<1x8x4xf32> to vector<8x4xf32>
    %c0_2 = arith.constant 0 : index
    %c0_3 = arith.constant 0 : index
    %c0_4 = arith.constant 0 : index
    %2 = vector.load %arg3[%c0_2, %c0_3, %c0_4] : memref<1x4x256xf32, #tpu.memory_space<vmem>>, vector<1x4x256xf32>
    %3 = vector.shape_cast %2 : vector<1x4x256xf32> to vector<4x256xf32>
    %cst = arith.constant dense<0.000000e+00> : vector<8x256xf32>
    %4 = tpu.matmul %1, %3, %cst {dimension_numbers = #tpu.dot_dimension_numbers<[1], [0], [0], [1], [0, 0, 1, 1], [], []>} : vector<8x4xf32>, vector<4x256xf32>, vector<8x256xf32> -> vector<8x256xf32>
    %c0_5 = arith.constant 0 : index
    %c0_6 = arith.constant 0 : index
    %5 = vector.load %arg4[%c0_5, %c0_6] : memref<256x896xf32, #tpu.memory_space<vmem>>, vector<256x896xf32>
    %cst_7 = arith.constant dense<0.000000e+00> : vector<8x896xf32>
    %6 = tpu.matmul %4, %5, %cst_7 {dimension_numbers = #tpu.dot_dimension_numbers<[1], [0], [0], [1], [0, 0, 1, 1], [], []>} : vector<8x256xf32>, vector<256x896xf32>, vector<8x896xf32> -> vector<8x896xf32>
    %cst_8 = arith.constant 0.000000e+00 : f32
    %7 = vector.broadcast %cst_8 : f32 to vector<8x896xf32>
    %8 = arith.maximumf %6, %7 : vector<8x896xf32>
    %9 = math.exp %8 : vector<8x896xf32>
    %cst_9 = arith.constant dense<0.000000e+00> : vector<8xf32>
    %10 = vector.multi_reduction <add>, %9, %cst_9 [1] : vector<8x896xf32> to vector<8xf32>
    %11 = vector.shape_cast %10 : vector<8xf32> to vector<8x1xf32>
    %cst_10 = arith.constant 1.120000e+02 : f32
    %12 = vector.broadcast %cst_10 : f32 to vector<8x1xf32>
    %13 = arith.subf %11, %12 : vector<8x1xf32>
    %14 = tpu.reciprocal %13 {approx = true} : vector<8x1xf32> -> vector<8x1xf32>
    %cst_11 = arith.constant 1.000000e+01 : f32
    %15 = vector.broadcast %cst_11 : f32 to vector<8x1xf32>
    %16 = arith.mulf %14, %15 : vector<8x1xf32>
    %17 = vector.broadcast %16 : vector<8x1xf32> to vector<8x896xf32>
    %18 = arith.mulf %8, %17 : vector<8x896xf32>
    %c0_12 = arith.constant 0 : index
    %c0_13 = arith.constant 0 : index
    %c0_14 = arith.constant 0 : index
    %19 = vector.load %arg5[%c0_12, %c0_13, %c0_14] : memref<1x8x896xf32, #tpu.memory_space<vmem>>, vector<1x8x896xf32>
    %20 = vector.shape_cast %19 : vector<1x8x896xf32> to vector<8x896xf32>
    %21 = vector.shape_cast %18 : vector<8x896xf32> to vector<1x8x896xf32>
    tpu.vector_store %arg5[%c0_12, %c0_13, %c0_14], %21 {strides = array<i32>} : memref<1x8x896xf32, #tpu.memory_space<vmem>>, vector<1x8x896xf32>,
    return
  }
  func.func @transform_0(%arg0: i32, %arg1: i32) -> (i32, i32, i32) {
    %c0_i32 = arith.constant 0 : i32
    %c0_i32_0 = arith.constant 0 : i32
    return %arg0, %arg1, %c0_i32 : i32, i32, i32
  }
  func.func @transform_1(%arg0: i32, %arg1: i32) -> (i32, i32, i32) {
    %c0_i32 = arith.constant 0 : i32
    %c0_i32_0 = arith.constant 0 : i32
    %c0_i32_1 = arith.constant 0 : i32
    return %arg0, %c0_i32, %c0_i32_0 : i32, i32, i32
  }
  func.func @transform_2(%arg0: i32, %arg1: i32) -> (i32, i32) {
    %c0_i32 = arith.constant 0 : i32
    %c0_i32_0 = arith.constant 0 : i32
    %c0_i32_1 = arith.constant 0 : i32
    return %c0_i32, %c0_i32_0 : i32, i32
  }
  func.func @transform_3(%arg0: i32, %arg1: i32) -> (i32, i32, i32) {
    %c0_i32 = arith.constant 0 : i32
    %c0_i32_0 = arith.constant 0 : i32
    return %arg0, %arg1, %c0_i32 : i32, i32, i32
  }
}

</mosaic_0001>

<llo_original>
// kernel: tpu_custom_call.1
$region0: #{tpu_custom_call.1}
  #allocation0 [shape = 'u32[]', space=smem, size = 0x4, offset = 0x4, fixed_abs, tag = 'smem constant byte address 0x4 - core index']
  #allocation1 [shape = 'u32[144,128]{1,0:T(1,128)}', space=vmem, size = 0x12000, scoped, tag = 'internal scratch']
  %s0 = inlined_call_operand.vmem [shape: f32[2,8,4], index: 0, kind: input, shape index: {}]
  %s1 = inlined_call_operand.vmem [shape: f32[2,4,256], index: 1, kind: input, shape index: {}]
  %s2 = inlined_call_operand.hbm [shape: f32[256,896], index: 2, kind: input, shape index: {}]
  %s3 = inlined_call_operand.hbm [shape: f32[2,8,896], index: 3, kind: output, shape index: {}]
  %s4 = sld [smem:[#allocation0]]
  $region49: #{tpu_custom_call.1} parent=0
    _
  %s6 = ssub.s32 1, %s4
  %s7 = scalar_select 0, %s6, %s4
  $region1: #{tpu_custom_call.1} parent=0
    #allocation2 [shape = 'u8[917504]{0}', space=vmem, size = 0xe0000, scoped, tag = 'input window, operand 2, single buffered']
    #allocation3 [shape = 's32[2]{0}', space=sflag, size = 0x8, scoped, tag = 'scoped memory for tpu_custom_call.1']
    #allocation4 [shape = 's32[2]{0}', space=sflag, size = 0x8, scoped, tag = 'scoped memory for tpu_custom_call.1']
    #allocation5 [shape = 'u8[57344]{0}', space=vmem, size = 0xe000, scoped, tag = 'output window, operand 0']
    %8 = vsyncpa [#allocation3], 0
    %9 = vsyncpa [#allocation4], 0
    %s10 = scalar_lea.sflag [#allocation4], 1
    %11 = vsyncpa %s10, 0
    loop: start=0, step=1, limit=4
    $region2: #{tpu_custom_call.1} parent=1 // loop_pre_header
      _
    $region3: #{tpu_custom_call.1} parent=1 // loop_header
      %s13 = sphi 0, %s17
      %p14 = scmp.ge.s32.totalorder %s13, 4
      %s20 = sphi 0, %s32
      %s21 = sphi 0, %s28
      %s22 = sphi 0, %s20
      %s23 = sphi 0, %s21
      %s24 = sphi 0, %s22
      %s25 = sphi 0, %s23
      %s37 = sphi 0, %s39
      %s40 = sphi 0, %s37
      %s41 = sphi 0, %s40
      %s57 = sphi 0, %s41
      %s63 = sphi 0, %s65
      %s66 = sphi 0, %s63
      %s67 = sphi 0, %s66
      %s83 = sphi 0, %s67
      %s87 = sphi 0, %s87
      %s89 = sphi 0, %s87
      %s90 = sphi 0, %s89
      %s104 = sphi 0, %s90
      %s112 = sphi 0, %s114
      %s115 = sphi 0, %s112
      %s116 = sphi 0, %s115
      %s132 = sphi 0, %s116
    $region4: #{tpu_custom_call.1} parent=1 // loop_header_branch
      %16 = sbr.rel (%p14) target = $region8
    $region5: #{tpu_custom_call.1} parent=1 // loop_body
      %s18 = ssub.s32 %s13, 1
      %s19 = ssub.s32 %s13, 2
      %s26 = sadd.s32 1, %s21
      %p27 = scmp.ge.s32.totalorder %s26, 1
      %s28 = scalar_select %p27, 0, %s26
      %s29 = sadd.s32 1, %s20
      %s30 = scalar_select %p27, %s29, %s20
      %p31 = scmp.ge.s32.totalorder %s30, 2
      %s32 = scalar_select %p31, 0, %s30
      %s33 = ssub.s32 %s20, %s32
      %s34 = ssub.s32 %s21, %s28
      %s35 = sor.u32 %s33, %s34
      %p36 = scmp.eq.s32.totalorder %s35, 0
      %s38 = sadd.s32 %s37, 1
      %s39 = scalar_select %p36, %s37, %s38
      %p42 = pneg %p36
      %p43 = scmp.eq.s32.totalorder %s13, 1
      %p44 = por %p42, %p43
      %p45 = scmp.ne.s32.totalorder %s37, %s40
      %p46 = scmp.eq.s32.totalorder %s13, 0
      %p47 = por %p45, %p46
      %p48 = scmp.ne.s32.totalorder %s37, %s40
      %p49 = scmp.eq.s32.totalorder %s18, 1
      %p50 = por %p48, %p49
      %p51 = scmp.ne.s32.totalorder %s40, %s41
      %p52 = scmp.eq.s32.totalorder %s18, 0
      %p53 = por %p51, %p52
      %p54 = scmp.ne.s32.totalorder %s40, %s41
      %p55 = scmp.eq.s32.totalorder %s19, 1
      %p56 = por %p54, %p55
      %p58 = scmp.ne.s32.totalorder %s41, %s57
      %p59 = scmp.eq.s32.totalorder %s19, 0
      %p60 = por %p58, %p59
      %s61 = ssub.s32 %s20, %s32
      %p62 = scmp.eq.s32.totalorder %s61, 0
      %s64 = sadd.s32 %s63, 1
      %s65 = scalar_select %p62, %s63, %s64
      %p68 = pneg %p62
      %p69 = scmp.eq.s32.totalorder %s13, 1
      %p70 = por %p68, %p69
      %p71 = scmp.ne.s32.totalorder %s63, %s66
      %p72 = scmp.eq.s32.totalorder %s13, 0
      %p73 = por %p71, %p72
      %p74 = scmp.ne.s32.totalorder %s63, %s66
      %p75 = scmp.eq.s32.totalorder %s18, 1
      %p76 = por %p74, %p75
      %p77 = scmp.ne.s32.totalorder %s66, %s67
      %p78 = scmp.eq.s32.totalorder %s18, 0
      %p79 = por %p77, %p78
      %p80 = scmp.ne.s32.totalorder %s66, %s67
      %p81 = scmp.eq.s32.totalorder %s19, 1
      %p82 = por %p80, %p81
      %p84 = scmp.ne.s32.totalorder %s67, %s83
      %p85 = scmp.eq.s32.totalorder %s19, 0
      %p86 = por %p84, %p85
      %s88 = sadd.s32 %s87, 1
      %p91 = scmp.eq.s32.totalorder %s13, 1
      %p92 = scmp.ne.s32.totalorder %s87, %s89
      %p93 = scmp.eq.s32.totalorder %s13, 0
      %p94 = por %p92, %p93
      %p95 = scmp.ne.s32.totalorder %s87, %s89
      %p96 = scmp.eq.s32.totalorder %s18, 1
      %p97 = por %p95, %p96
      %p98 = scmp.ne.s32.totalorder %s89, %s90
      %p99 = scmp.eq.s32.totalorder %s18, 0
      %p100 = por %p98, %p99
      %p101 = scmp.ne.s32.totalorder %s89, %s90
      %p102 = scmp.eq.s32.totalorder %s19, 1
      %p103 = por %p101, %p102
      %p105 = scmp.ne.s32.totalorder %s90, %s104
      %p106 = scmp.eq.s32.totalorder %s19, 0
      %p107 = por %p105, %p106
      %s108 = ssub.s32 %s20, %s32
      %s109 = ssub.s32 %s21, %s28
      %s110 = sor.u32 %s108, %s109
      %p111 = scmp.eq.s32.totalorder %s110, 0
      %s113 = sadd.s32 %s112, 1
      %s114 = scalar_select %p111, %s112, %s113
      %p117 = pneg %p111
      %p118 = scmp.eq.s32.totalorder %s13, 1
      %p119 = por %p117, %p118
      %p120 = scmp.ne.s32.totalorder %s112, %s115
      %p121 = scmp.eq.s32.totalorder %s13, 0
      %p122 = por %p120, %p121
      %p123 = scmp.ne.s32.totalorder %s112, %s115
      %p124 = scmp.eq.s32.totalorder %s18, 1
      %p125 = por %p123, %p124
      %p126 = scmp.ne.s32.totalorder %s115, %s116
      %p127 = scmp.eq.s32.totalorder %s18, 0
      %p128 = por %p126, %p127
      %p129 = scmp.ne.s32.totalorder %s115, %s116
      %p130 = scmp.eq.s32.totalorder %s19, 1
      %p131 = por %p129, %p130
      %p133 = scmp.ne.s32.totalorder %s116, %s132
      %p134 = scmp.eq.s32.totalorder %s19, 0
      %p135 = por %p133, %p134
      %p136 = scmp.le.s32.totalorder 1, %s13
      %p137 = scmp.lt.s32.totalorder %s13, 3
      %p138 = pnand %p136, %p137
      %p139 = pneg %p138
      // Predicated region
      $region9: #{tpu_custom_call.1} parent=5 // pred_check
        _
      $region10: #{tpu_custom_call.1} parent=5 // pred_check_branch
        %141 = sbr.rel (%p138) target = $region12
      $region11: #{tpu_custom_call.1} parent=5 // pred_region
        %s142 = ssub.s32 %s13, 1
        // Predicated region
        $region13: #{tpu_custom_call.1} parent=11 // pred_check
          %p143 = pneg %p100
        $region14: #{tpu_custom_call.1} parent=11 // pred_check_branch
          %145 = sbr.rel (%p143) target = $region16
        $region15: #{tpu_custom_call.1} parent=11 // pred_region
          %s147 = ssub.s32 28672, 28672
          %148 = vsyncadd [#allocation3], %s147
          %s149 = sshll.u32 [#allocation2], 4
          %s150 = int_to_ptr.vmem [resolvable:$true] %s149
          %155 = dma.hbm_to_vmem [thread:$0]  %s2, 28672, %s150, [#allocation3], 896, 896, 56
        $region16: #{tpu_custom_call.1} parent=11 // pred_fallthru
          _
      $region12: #{tpu_custom_call.1} parent=5 // pred_fallthru
        _
      %p156 = scmp.lt.s32.totalorder %s13, 2
      // Predicated region
      $region17: #{tpu_custom_call.1} parent=5 // pred_check
        %p157 = pneg %p156
      $region18: #{tpu_custom_call.1} parent=5 // pred_check_branch
        %159 = sbr.rel (%p157) target = $region20
      $region19: #{tpu_custom_call.1} parent=5 // pred_region
        // Predicated region
        $region21: #{tpu_custom_call.1} parent=19 // pred_check
          %p160 = pneg %p47
        $region22: #{tpu_custom_call.1} parent=19 // pred_check_branch
          %162 = sbr.rel (%p160) target = $region24
        $region23: #{tpu_custom_call.1} parent=19 // pred_region
          %p163 = scmp.lt.s32.totalorder %s20, 1
          %s164 = scalar_select %p163, %s20, 1
          %p165 = scmp.lt.s32.totalorder %s21, 0
          %s166 = scalar_select %p165, %s21, 0
          %s167 = sadd.s32 %s166, %s164
          %s168 = smul.addr %s167, 8
          %s169 = scalar_lea.vmem %s0, %s168
        $region24: #{tpu_custom_call.1} parent=19 // pred_fallthru
          _
        // Predicated region
        $region25: #{tpu_custom_call.1} parent=19 // pred_check
          %p170 = pneg %p73
        $region26: #{tpu_custom_call.1} parent=19 // pred_check_branch
          %172 = sbr.rel (%p170) target = $region28
        $region27: #{tpu_custom_call.1} parent=19 // pred_region
          %p173 = scmp.lt.s32.totalorder %s20, 1
          %s174 = scalar_select %p173, %s20, 1
          %s175 = smul.addr %s174, 2
          %s176 = smul.addr %s175, 4
          %s177 = scalar_lea.vmem %s1, %s176
        $region28: #{tpu_custom_call.1} parent=19 // pred_fallthru
          _
      $region20: #{tpu_custom_call.1} parent=5 // pred_fallthru
        _
      %p178 = scmp.le.s32.totalorder 1, %s13
      %p179 = scmp.lt.s32.totalorder %s13, 3
      %p180 = pnand %p178, %p179
      %p181 = pneg %p180
      // Predicated region
      $region29: #{tpu_custom_call.1} parent=5 // pred_check
        _
      $region30: #{tpu_custom_call.1} parent=5 // pred_check_branch
        %183 = sbr.rel (%p180) target = $region32
      $region31: #{tpu_custom_call.1} parent=5 // pred_region
        %s184 = ssub.s32 %s13, 1
        // Predicated region
        $region33: #{tpu_custom_call.1} parent=31 // pred_check
          %p185 = pneg %p100
        $region34: #{tpu_custom_call.1} parent=31 // pred_check_branch
          %187 = sbr.rel (%p185) target = $region36
        $region35: #{tpu_custom_call.1} parent=31 // pred_region
          %188 = dma.done [#allocation3], 28672
        $region36: #{tpu_custom_call.1} parent=31 // pred_fallthru
          _
        %p189 = scmp.lt.s32.totalorder %s22, 1
        %s190 = scalar_select %p189, %s22, 1
        %p191 = scmp.lt.s32.totalorder %s23, 0
        %s192 = scalar_select %p191, %s23, 0
        %s193 = sadd.s32 %s192, %s190
        %s194 = smul.addr %s193, 8
        %s195 = scalar_lea.vmem %s0, %s194
        %p196 = pneg %p53
        %p197 = pneg %p50
        %p198 = scmp.lt.s32.totalorder %s22, 1
        %s199 = scalar_select %p198, %s22, 1
        %s200 = smul.addr %s199, 2
        %s201 = smul.addr %s200, 4
        %s202 = scalar_lea.vmem %s1, %s201
        %p203 = pneg %p79
        %p204 = pneg %p76
        %p205 = pneg %p100
        %p206 = pneg %p97
        %p207 = pneg %p128
        %p208 = pneg %p125
        %s209 = sand.u32 %s115, 1
        %s210 = scalar_lea.sflag [#allocation4], %s209
        %s211 = sand.u32 %s115, 1
        %s212 = smul.addr %s211, 56
        %s213 = scalar_lea.vmem [#allocation5], %s212
        %p214 = scmp.lt.s32.totalorder %s22, 1
        %s215 = scalar_select %p214, %s22, 1
        %p216 = scmp.lt.s32.totalorder %s23, 0
        %s217 = scalar_select %p216, %s23, 0
        %s218 = sadd.s32 %s217, %s215
        %s219 = smul.addr %s218, 8
        %s220 = scalar_lea.vmem %s0, %s219
        %p221 = scmp.lt.s32.totalorder %s22, 1
        %s222 = scalar_select %p221, %s22, 1
        %s223 = smul.addr %s222, 2
        %s224 = smul.addr %s223, 4
        %s225 = scalar_lea.vmem %s1, %s224
        %v226 = vld [vmem:[%s220] sm:$0xff]
        %v227 = vld [vmem:[%s225] sm:$0xff]
        %v229 = vcombine.high %v227, %v227
        %vm230 = vcmask 31744
        %v232 = vsel %vm230, %v226, 0
        %vm234 = vcmask 1043456
        %v235 = vsel %vm234, %v227, 0
        %v237 = vsel %vm234, %v229, 0
        %239 = vmatprep.subr.mxu0 %v237
        %240 = vmatpush1.msra.mxu0 %v235
        %241 = vmatprep.subr.mxu0 0.0
        %242 = vmatpush1.msra.mxu0 0.0
        %243 = vmatprep.subr.mxu0 0.0
        %244 = vmatpush1.msra.mxu0 0.0
        %245 = vmatprep.subr.mxu0 0.0
        %246 = vmatpush1.msra.mxu0 0.0
        %247 = vmatprep.subr.mxu0 0.0
        %248 = vmatpush1.msra.mxu0 0.0
        %249 = vmatprep.subr.mxu0 0.0
        %250 = vmatpush1.msra.mxu0 0.0
        %251 = vmatprep.subr.mxu0 0.0
        %252 = vmatpush1.msra.mxu0 0.0
        %253 = vmatprep.subr.mxu0 0.0
        %254 = vmatpush1.msra.mxu0 0.0
        %255 = vmatprep.subr.mxu0 0.0
        %256 = vmatpush1.msra.mxu0 0.0
        %257 = vmatprep.subr.mxu0 0.0
        %258 = vmatpush1.msra.mxu0 0.0
        %259 = vmatprep.subr.mxu0 0.0
        %260 = vmatpush1.msra.mxu0 0.0
        %261 = vmatprep.subr.mxu0 0.0
        %262 = vmatpush1.msra.mxu0 0.0
        %263 = vmatprep.subr.mxu0 0.0
        %264 = vmatpush1.msra.mxu0 0.0
        %265 = vmatprep.subr.mxu0 0.0
        %266 = vmatpush1.msra.mxu0 0.0
        %267 = vmatprep.subr.mxu0 0.0
        %268 = vmatpush1.msra.mxu0 0.0
        %269 = vmatprep.subr.mxu0 0.0
        %270 = vmatpush1.msra.mxu0 0.0
        %271 = vmatprep.subr.mxu0 0.0
        %272 = vmatpush1.msra.mxu0 0.0
        %273 = vmatprep.subr.mxu0 0.0
        %274 = vmatpush1.msra.mxu0 0.0
        %275 = vmatprep.subr.mxu0 0.0
        %276 = vmatpush1.msra.mxu0 0.0
        %277 = vmatprep.subr.mxu0 0.0
        %278 = vmatpush1.msra.mxu0 0.0
        %279 = vmatprep.subr.mxu0 0.0
        %280 = vmatpush1.msra.mxu0 0.0
        %281 = vmatprep.subr.mxu0 0.0
        %282 = vmatpush1.msra.mxu0 0.0
        %283 = vmatprep.subr.mxu0 0.0
        %284 = vmatpush1.msra.mxu0 0.0
        %285 = vmatprep.subr.mxu0 0.0
        %286 = vmatpush1.msra.mxu0 0.0
        %287 = vmatprep.subr.mxu0 0.0
        %288 = vmatpush1.msra.mxu0 0.0
        %289 = vmatprep.subr.mxu0 0.0
        %290 = vmatpush1.msra.mxu0 0.0
        %291 = vmatprep.subr.mxu0 0.0
        %292 = vmatpush1.msra.mxu0 0.0
        %293 = vmatprep.subr.mxu0 0.0
        %294 = vmatpush1.msra.mxu0 0.0
        %295 = vmatprep.subr.mxu0 0.0
        %296 = vmatpush1.msra.mxu0 0.0
        %297 = vmatprep.subr.mxu0 0.0
        %298 = vmatpush1.msra.mxu0 0.0
        %299 = vmatprep.subr.mxu0 0.0
        %300 = vmatpush1.msra.mxu0 0.0
        %301 = vmatprep.subr.mxu0 0.0
        %302 = vmatpush1.msra.mxu0 0.0
        %303 = vmatprep.mubr.f32.mxu0 0.0
        %304 = vmatmul.mubr.f32.gmra.mrb[0].mxu0 %v232
        %v305 = vpop.f32.mrb[0].mxu0
        %v306 = vadd.f32 0.0, %v305
        %v307 = vpop.f32.mrb[0].mxu0
        %v308 = vadd.f32 0.0, %v307
        %309 = vdwg.mxu0
        %v310 = vld [vmem:[#allocation2] sm:$0xff]
        %v311 = vld [vmem:[#allocation2 + $0x8] sm:$0xff]
        %v312 = vld [vmem:[#allocation2 + $0x10] sm:$0xff]
        %v313 = vld [vmem:[#allocation2 + $0x18] sm:$0xff]
        %v314 = vld [vmem:[#allocation2 + $0x20] sm:$0xff]
        %v315 = vld [vmem:[#allocation2 + $0x28] sm:$0xff]
        %v316 = vld [vmem:[#allocation2 + $0x30] sm:$0xff]
        %v317 = vld [vmem:[#allocation2 + $0x38] sm:$0xff]
        %v318 = vld [vmem:[#allocation2 + $0x40] sm:$0xff]
        %v319 = vld [vmem:[#allocation2 + $0x48] sm:$0xff]
        %v320 = vld [vmem:[#allocation2 + $0x50] sm:$0xff]
        %v321 = vld [vmem:[#allocation2 + $0x58] sm:$0xff]
        %v322 = vld [vmem:[#allocation2 + $0x60] sm:$0xff]
        %v323 = vld [vmem:[#allocation2 + $0x68] sm:$0xff]
        %v324 = vld [vmem:[#allocation2 + $0x70] sm:$0xff]
        %v325 = vld [vmem:[#allocation2 + $0x78] sm:$0xff]
        %v326 = vld [vmem:[#allocation2 + $0x80] sm:$0xff]
        %v327 = vld [vmem:[#allocation2 + $0x88] sm:$0xff]
        %v328 = vld [vmem:[#allocation2 + $0x90] sm:$0xff]
        %v329 = vld [vmem:[#allocation2 + $0x98] sm:$0xff]
        %v330 = vld [vmem:[#allocation2 + $0xa0] sm:$0xff]
        %v331 = vld [vmem:[#allocation2 + $0xa8] sm:$0xff]
        %v332 = vld [vmem:[#allocation2 + $0xb0] sm:$0xff]
        %v333 = vld [vmem:[#allocation2 + $0xb8] sm:$0xff]
        %v334 = vld [vmem:[#allocation2 + $0xc0] sm:$0xff]
        %v335 = vld [vmem:[#allocation2 + $0xc8] sm:$0xff]
        %v336 = vld [vmem:[#allocation2 + $0xd0] sm:$0xff]
        %v337 = vld [vmem:[#allocation2 + $0xd8] sm:$0xff]
        %v338 = vld [vmem:[#allocation2 + $0xe0] sm:$0xff]
        %v339 = vld [vmem:[#allocation2 + $0xe8] sm:$0xff]
        %v340 = vld [vmem:[#allocation2 + $0xf0] sm:$0xff]
        %v341 = vld [vmem:[#allocation2 + $0xf8] sm:$0xff]
        %v342 = vld [vmem:[#allocation2 + $0x100] sm:$0xff]
        %v343 = vld [vmem:[#allocation2 + $0x108] sm:$0xff]
        %v344 = vld [vmem:[#allocation2 + $0x110] sm:$0xff]
        %v345 = vld [vmem:[#allocation2 + $0x118] sm:$0xff]
        %v346 = vld [vmem:[#allocation2 + $0x120] sm:$0xff]
        %v347 = vld [vmem:[#allocation2 + $0x128] sm:$0xff]
        %v348 = vld [vmem:[#allocation2 + $0x130] sm:$0xff]
        %v349 = vld [vmem:[#allocation2 + $0x138] sm:$0xff]
        %v350 = vld [vmem:[#allocation2 + $0x140] sm:$0xff]
        %v351 = vld [vmem:[#allocation2 + $0x148] sm:$0xff]
        %v352 = vld [vmem:[#allocation2 + $0x150] sm:$0xff]
        %v353 = vld [vmem:[#allocation2 + $0x158] sm:$0xff]
        %v354 = vld [vmem:[#allocation2 + $0x160] sm:$0xff]
        %v355 = vld [vmem:[#allocation2 + $0x168] sm:$0xff]
        %v356 = vld [vmem:[#allocation2 + $0x170] sm:$0xff]
        %v357 = vld [vmem:[#allocation2 + $0x178] sm:$0xff]
        %v358 = vld [vmem:[#allocation2 + $0x180] sm:$0xff]
        %v359 = vld [vmem:[#allocation2 + $0x188] sm:$0xff]
        %v360 = vld [vmem:[#allocation2 + $0x190] sm:$0xff]
        %v361 = vld [vmem:[#allocation2 + $0x198] sm:$0xff]
        %v362 = vld [vmem:[#allocation2 + $0x1a0] sm:$0xff]
        %v363 = vld [vmem:[#allocation2 + $0x1a8] sm:$0xff]
        %v364 = vld [vmem:[#allocation2 + $0x1b0] sm:$0xff]
        %v365 = vld [vmem:[#allocation2 + $0x1b8] sm:$0xff]
        %v366 = vld [vmem:[#allocation2 + $0x1c0] sm:$0xff]
        %v367 = vld [vmem:[#allocation2 + $0x1c8] sm:$0xff]
        %v368 = vld [vmem:[#allocation2 + $0x1d0] sm:$0xff]
        %v369 = vld [vmem:[#allocation2 + $0x1d8] sm:$0xff]
        %v370 = vld [vmem:[#allocation2 + $0x1e0] sm:$0xff]
        %v371 = vld [vmem:[#allocation2 + $0x1e8] sm:$0xff]
        %v372 = vld [vmem:[#allocation2 + $0x1f0] sm:$0xff]
        %v373 = vld [vmem:[#allocation2 + $0x1f8] sm:$0xff]
        %v374 = vld [vmem:[#allocation2 + $0x200] sm:$0xff]
        %v375 = vld [vmem:[#allocation2 + $0x208] sm:$0xff]
        %v376 = vld [vmem:[#allocation2 + $0x210] sm:$0xff]
        %v377 = vld [vmem:[#allocation2 + $0x218] sm:$0xff]
        %v378 = vld [vmem:[#allocation2 + $0x220] sm:$0xff]
        %v379 = vld [vmem:[#allocation2 + $0x228] sm:$0xff]
        %v380 = vld [vmem:[#allocation2 + $0x230] sm:$0xff]
        %v381 = vld [vmem:[#allocation2 + $0x238] sm:$0xff]
        %v382 = vld [vmem:[#allocation2 + $0x240] sm:$0xff]
        %v383 = vld [vmem:[#allocation2 + $0x248] sm:$0xff]
        %v384 = vld [vmem:[#allocation2 + $0x250] sm:$0xff]
        %v385 = vld [vmem:[#allocation2 + $0x258] sm:$0xff]
        %v386 = vld [vmem:[#allocation2 + $0x260] sm:$0xff]
        %v387 = vld [vmem:[#allocation2 + $0x268] sm:$0xff]
        %v388 = vld [vmem:[#allocation2 + $0x270] sm:$0xff]
        %v389 = vld [vmem:[#allocation2 + $0x278] sm:$0xff]
        %v390 = vld [vmem:[#allocation2 + $0x280] sm:$0xff]
        %v391 = vld [vmem:[#allocation2 + $0x288] sm:$0xff]
        %v392 = vld [vmem:[#allocation2 + $0x290] sm:$0xff]
        %v393 = vld [vmem:[#allocation2 + $0x298] sm:$0xff]
        %v394 = vld [vmem:[#allocation2 + $0x2a0] sm:$0xff]
        %v395 = vld [vmem:[#allocation2 + $0x2a8] sm:$0xff]
        %v396 = vld [vmem:[#allocation2 + $0x2b0] sm:$0xff]
        %v397 = vld [vmem:[#allocation2 + $0x2b8] sm:$0xff]
        %v398 = vld [vmem:[#allocation2 + $0x2c0] sm:$0xff]
        %v399 = vld [vmem:[#allocation2 + $0x2c8] sm:$0xff]
        %v400 = vld [vmem:[#allocation2 + $0x2d0] sm:$0xff]
        %v401 = vld [vmem:[#allocation2 + $0x2d8] sm:$0xff]
        %v402 = vld [vmem:[#allocation2 + $0x2e0] sm:$0xff]
        %v403 = vld [vmem:[#allocation2 + $0x2e8] sm:$0xff]
        %v404 = vld [vmem:[#allocation2 + $0x2f0] sm:$0xff]
        %v405 = vld [vmem:[#allocation2 + $0x2f8] sm:$0xff]
        %v406 = vld [vmem:[#allocation2 + $0x300] sm:$0xff]
        %v407 = vld [vmem:[#allocation2 + $0x308] sm:$0xff]
        %v408 = vld [vmem:[#allocation2 + $0x310] sm:$0xff]
        %v409 = vld [vmem:[#allocation2 + $0x318] sm:$0xff]
        %v410 = vld [vmem:[#allocation2 + $0x320] sm:$0xff]
        %v411 = vld [vmem:[#allocation2 + $0x328] sm:$0xff]
        %v412 = vld [vmem:[#allocation2 + $0x330] sm:$0xff]
        %v413 = vld [vmem:[#allocation2 + $0x338] sm:$0xff]
        %v414 = vld [vmem:[#allocation2 + $0x340] sm:$0xff]
        %v415 = vld [vmem:[#allocation2 + $0x348] sm:$0xff]
        %v416 = vld [vmem:[#allocation2 + $0x350] sm:$0xff]
        %v417 = vld [vmem:[#allocation2 + $0x358] sm:$0xff]
        %v418 = vld [vmem:[#allocation2 + $0x360] sm:$0xff]
        %v419 = vld [vmem:[#allocation2 + $0x368] sm:$0xff]
        %v420 = vld [vmem:[#allocation2 + $0x370] sm:$0xff]
        %v421 = vld [vmem:[#allocation2 + $0x378] sm:$0xff]
        %v422 = vld [vmem:[#allocation2 + $0x380] sm:$0xff]
        %v423 = vld [vmem:[#allocation2 + $0x388] sm:$0xff]
        %v424 = vld [vmem:[#allocation2 + $0x390] sm:$0xff]
        %v425 = vld [vmem:[#allocation2 + $0x398] sm:$0xff]
        %v426 = vld [vmem:[#allocation2 + $0x3a0] sm:$0xff]
        %v427 = vld [vmem:[#allocation2 + $0x3a8] sm:$0xff]
        %v428 = vld [vmem:[#allocation2 + $0x3b0] sm:$0xff]
        %v429 = vld [vmem:[#allocation2 + $0x3b8] sm:$0xff]
        %v430 = vld [vmem:[#allocation2 + $0x3c0] sm:$0xff]
        %v431 = vld [vmem:[#allocation2 + $0x3c8] sm:$0xff]
        %v432 = vld [vmem:[#allocation2 + $0x3d0] sm:$0xff]
        %v433 = vld [vmem:[#allocation2 + $0x3d8] sm:$0xff]
        %v434 = vld [vmem:[#allocation2 + $0x3e0] sm:$0xff]
        %v435 = vld [vmem:[#allocation2 + $0x3e8] sm:$0xff]
        %v436 = vld [vmem:[#allocation2 + $0x3f0] sm:$0xff]
        %v437 = vld [vmem:[#allocation2 + $0x3f8] sm:$0xff]
        %v438 = vld [vmem:[#allocation2 + $0x400] sm:$0xff]
        %v439 = vld [vmem:[#allocation2 + $0x408] sm:$0xff]
        %v440 = vld [vmem:[#allocation2 + $0x410] sm:$0xff]
        %v441 = vld [vmem:[#allocation2 + $0x418] sm:$0xff]
        %v442 = vld [vmem:[#allocation2 + $0x420] sm:$0xff]
        %v443 = vld [vmem:[#allocation2 + $0x428] sm:$0xff]
        %v444 = vld [vmem:[#allocation2 + $0x430] sm:$0xff]
        %v445 = vld [vmem:[#allocation2 + $0x438] sm:$0xff]
        %v446 = vld [vmem:[#allocation2 + $0x440] sm:$0xff]
        %v447 = vld [vmem:[#allocation2 + $0x448] sm:$0xff]
        %v448 = vld [vmem:[#allocation2 + $0x450] sm:$0xff]
        %v449 = vld [vmem:[#allocation2 + $0x458] sm:$0xff]
        %v450 = vld [vmem:[#allocation2 + $0x460] sm:$0xff]
        %v451 = vld [vmem:[#allocation2 + $0x468] sm:$0xff]
        %v452 = vld [vmem:[#allocation2 + $0x470] sm:$0xff]
        %v453 = vld [vmem:[#allocation2 + $0x478] sm:$0xff]
        %v454 = vld [vmem:[#allocation2 + $0x480] sm:$0xff]
        %v455 = vld [vmem:[#allocation2 + $0x488] sm:$0xff]
        %v456 = vld [vmem:[#allocation2 + $0x490] sm:$0xff]
        %v457 = vld [vmem:[#allocation2 + $0x498] sm:$0xff]
        %v458 = vld [vmem:[#allocation2 + $0x4a0] sm:$0xff]
        %v459 = vld [vmem:[#allocation2 + $0x4a8] sm:$0xff]
        %v460 = vld [vmem:[#allocation2 + $0x4b0] sm:$0xff]
        %v461 = vld [vmem:[#allocation2 + $0x4b8] sm:$0xff]
        %v462 = vld [vmem:[#allocation2 + $0x4c0] sm:$0xff]
        %v463 = vld [vmem:[#allocation2 + $0x4c8] sm:$0xff]
        %v464 = vld [vmem:[#allocation2 + $0x4d0] sm:$0xff]
        %v465 = vld [vmem:[#allocation2 + $0x4d8] sm:$0xff]
        %v466 = vld [vmem:[#allocation2 + $0x4e0] sm:$0xff]
        %v467 = vld [vmem:[#allocation2 + $0x4e8] sm:$0xff]
        %v468 = vld [vmem:[#allocation2 + $0x4f0] sm:$0xff]
        %v469 = vld [vmem:[#allocation2 + $0x4f8] sm:$0xff]
        %v470 = vld [vmem:[#allocation2 + $0x500] sm:$0xff]
        %v471 = vld [vmem:[#allocation2 + $0x508] sm:$0xff]
        %v472 = vld [vmem:[#allocation2 + $0x510] sm:$0xff]
        %v473 = vld [vmem:[#allocation2 + $0x518] sm:$0xff]
        %v474 = vld [vmem:[#allocation2 + $0x520] sm:$0xff]
        %v475 = vld [vmem:[#allocation2 + $0x528] sm:$0xff]
        %v476 = vld [vmem:[#allocation2 + $0x530] sm:$0xff]
        %v477 = vld [vmem:[#allocation2 + $0x538] sm:$0xff]
        %v478 = vld [vmem:[#allocation2 + $0x540] sm:$0xff]
        %v479 = vld [vmem:[#allocation2 + $0x548] sm:$0xff]
        %v480 = vld [vmem:[#allocation2 + $0x550] sm:$0xff]
        %v481 = vld [vmem:[#allocation2 + $0x558] sm:$0xff]
        %v482 = vld [vmem:[#allocation2 + $0x560] sm:$0xff]
        %v483 = vld [vmem:[#allocation2 + $0x568] sm:$0xff]
        %v484 = vld [vmem:[#allocation2 + $0x570] sm:$0xff]
        %v485 = vld [vmem:[#allocation2 + $0x578] sm:$0xff]
        %v486 = vld [vmem:[#allocation2 + $0x580] sm:$0xff]
        %v487 = vld [vmem:[#allocation2 + $0x588] sm:$0xff]
        %v488 = vld [vmem:[#allocation2 + $0x590] sm:$0xff]
        %v489 = vld [vmem:[#allocation2 + $0x598] sm:$0xff]
        %v490 = vld [vmem:[#allocation2 + $0x5a0] sm:$0xff]
        %v491 = vld [vmem:[#allocation2 + $0x5a8] sm:$0xff]
        %v492 = vld [vmem:[#allocation2 + $0x5b0] sm:$0xff]
        %v493 = vld [vmem:[#allocation2 + $0x5b8] sm:$0xff]
        %v494 = vld [vmem:[#allocation2 + $0x5c0] sm:$0xff]
        %v495 = vld [vmem:[#allocation2 + $0x5c8] sm:$0xff]
        %v496 = vld [vmem:[#allocation2 + $0x5d0] sm:$0xff]
        %v497 = vld [vmem:[#allocation2 + $0x5d8] sm:$0xff]
        %v498 = vld [vmem:[#allocation2 + $0x5e0] sm:$0xff]
        %v499 = vld [vmem:[#allocation2 + $0x5e8] sm:$0xff]
        %v500 = vld [vmem:[#allocation2 + $0x5f0] sm:$0xff]
        %v501 = vld [vmem:[#allocation2 + $0x5f8] sm:$0xff]
        %v502 = vld [vmem:[#allocation2 + $0x600] sm:$0xff]
        %v503 = vld [vmem:[#allocation2 + $0x608] sm:$0xff]
        %v504 = vld [vmem:[#allocation2 + $0x610] sm:$0xff]
        %v505 = vld [vmem:[#allocation2 + $0x618] sm:$0xff]
        %v506 = vld [vmem:[#allocation2 + $0x620] sm:$0xff]
        %v507 = vld [vmem:[#allocation2 + $0x628] sm:$0xff]
        %v508 = vld [vmem:[#allocation2 + $0x630] sm:$0xff]
        %v509 = vld [vmem:[#allocation2 + $0x638] sm:$0xff]
        %v510 = vld [vmem:[#allocation2 + $0x640] sm:$0xff]
        %v511 = vld [vmem:[#allocation2 + $0x648] sm:$0xff]
        %v512 = vld [vmem:[#allocation2 + $0x650] sm:$0xff]
        %v513 = vld [vmem:[#allocation2 + $0x658] sm:$0xff]
        %v514 = vld [vmem:[#allocation2 + $0x660] sm:$0xff]
        %v515 = vld [vmem:[#allocation2 + $0x668] sm:$0xff]
        %v516 = vld [vmem:[#allocation2 + $0x670] sm:$0xff]
        %v517 = vld [vmem:[#allocation2 + $0x678] sm:$0xff]
        %v518 = vld [vmem:[#allocation2 + $0x680] sm:$0xff]
        %v519 = vld [vmem:[#allocation2 + $0x688] sm:$0xff]
        %v520 = vld [vmem:[#allocation2 + $0x690] sm:$0xff]
        %v521 = vld [vmem:[#allocation2 + $0x698] sm:$0xff]
        %v522 = vld [vmem:[#allocation2 + $0x6a0] sm:$0xff]
        %v523 = vld [vmem:[#allocation2 + $0x6a8] sm:$0xff]
        %v524 = vld [vmem:[#allocation2 + $0x6b0] sm:$0xff]
        %v525 = vld [vmem:[#allocation2 + $0x6b8] sm:$0xff]
        %v526 = vld [vmem:[#allocation2 + $0x6c0] sm:$0xff]
        %v527 = vld [vmem:[#allocation2 + $0x6c8] sm:$0xff]
        %v528 = vld [vmem:[#allocation2 + $0x6d0] sm:$0xff]
        %v529 = vld [vmem:[#allocation2 + $0x6d8] sm:$0xff]
        %v530 = vld [vmem:[#allocation2 + $0x6e0] sm:$0xff]
        %v531 = vld [vmem:[#allocation2 + $0x6e8] sm:$0xff]
        %v532 = vld [vmem:[#allocation2 + $0x6f0] sm:$0xff]
        %v533 = vld [vmem:[#allocation2 + $0x6f8] sm:$0xff]
        %534 = vmatprep.subr.mxu0 %v311
        %535 = vmatpush1.msra.mxu0 %v310
        %536 = vmatprep.subr.mxu0 %v318
        %537 = vmatpush1.msra.mxu0 %v317
        %538 = vmatprep.subr.mxu0 %v325
        %539 = vmatpush1.msra.mxu0 %v324
        %540 = vmatprep.subr.mxu0 %v332
        %541 = vmatpush1.msra.mxu0 %v331
        %542 = vmatprep.subr.mxu0 %v339
        %543 = vmatpush1.msra.mxu0 %v338
        %544 = vmatprep.subr.mxu0 %v346
        %545 = vmatpush1.msra.mxu0 %v345
        %546 = vmatprep.subr.mxu0 %v353
        %547 = vmatpush1.msra.mxu0 %v352
        %548 = vmatprep.subr.mxu0 %v360
        %549 = vmatpush1.msra.mxu0 %v359
        %550 = vmatprep.subr.mxu0 %v367
        %551 = vmatpush1.msra.mxu0 %v366
        %552 = vmatprep.subr.mxu0 %v374
        %553 = vmatpush1.msra.mxu0 %v373
        %554 = vmatprep.subr.mxu0 %v381
        %555 = vmatpush1.msra.mxu0 %v380
        %556 = vmatprep.subr.mxu0 %v388
        %557 = vmatpush1.msra.mxu0 %v387
        %558 = vmatprep.subr.mxu0 %v395
        %559 = vmatpush1.msra.mxu0 %v394
        %560 = vmatprep.subr.mxu0 %v402
        %561 = vmatpush1.msra.mxu0 %v401
        %562 = vmatprep.subr.mxu0 %v409
        %563 = vmatpush1.msra.mxu0 %v408
        %564 = vmatprep.subr.mxu0 %v416
        %565 = vmatpush1.msra.mxu0 %v415
        %566 = vmatprep.subr.mxu0 %v423
        %567 = vmatpush1.msra.mxu0 %v422
        %568 = vmatprep.subr.mxu0 %v430
        %569 = vmatpush1.msra.mxu0 %v429
        %570 = vmatprep.subr.mxu0 %v437
        %571 = vmatpush1.msra.mxu0 %v436
        %572 = vmatprep.subr.mxu0 %v444
        %573 = vmatpush1.msra.mxu0 %v443
        %574 = vmatprep.subr.mxu0 %v451
        %575 = vmatpush1.msra.mxu0 %v450
        %576 = vmatprep.subr.mxu0 %v458
        %577 = vmatpush1.msra.mxu0 %v457
        %578 = vmatprep.subr.mxu0 %v465
        %579 = vmatpush1.msra.mxu0 %v464
        %580 = vmatprep.subr.mxu0 %v472
        %581 = vmatpush1.msra.mxu0 %v471
        %582 = vmatprep.subr.mxu0 %v479
        %583 = vmatpush1.msra.mxu0 %v478
        %584 = vmatprep.subr.mxu0 %v486
        %585 = vmatpush1.msra.mxu0 %v485
        %586 = vmatprep.subr.mxu0 %v493
        %587 = vmatpush1.msra.mxu0 %v492
        %588 = vmatprep.subr.mxu0 %v500
        %589 = vmatpush1.msra.mxu0 %v499
        %590 = vmatprep.subr.mxu0 %v507
        %591 = vmatpush1.msra.mxu0 %v506
        %592 = vmatprep.subr.mxu0 %v514
        %593 = vmatpush1.msra.mxu0 %v513
        %594 = vmatprep.subr.mxu0 %v521
        %595 = vmatpush1.msra.mxu0 %v520
        %596 = vmatprep.subr.mxu0 %v528
        %597 = vmatpush1.msra.mxu0 %v527
        %598 = vmatprep.mubr.f32.mxu0 %v308
        %599 = vmatmul.mubr.f32.gmra.mrb[0].mxu0 %v306
        %v600 = vpop.f32.mrb[0].mxu0
        %v601 = vadd.f32 0.0, %v600
        %v602 = vpop.f32.mrb[0].mxu0
        %v603 = vadd.f32 0.0, %v602
        %604 = vdwg.mxu0
        %605 = vmatprep.subr.mxu0 %v313
        %606 = vmatpush1.msra.mxu0 %v312
        %607 = vmatprep.subr.mxu0 %v320
        %608 = vmatpush1.msra.mxu0 %v319
        %609 = vmatprep.subr.mxu0 %v327
        %610 = vmatpush1.msra.mxu0 %v326
        %611 = vmatprep.subr.mxu0 %v334
        %612 = vmatpush1.msra.mxu0 %v333
        %613 = vmatprep.subr.mxu0 %v341
        %614 = vmatpush1.msra.mxu0 %v340
        %615 = vmatprep.subr.mxu0 %v348
        %616 = vmatpush1.msra.mxu0 %v347
        %617 = vmatprep.subr.mxu0 %v355
        %618 = vmatpush1.msra.mxu0 %v354
        %619 = vmatprep.subr.mxu0 %v362
        %620 = vmatpush1.msra.mxu0 %v361
        %621 = vmatprep.subr.mxu0 %v369
        %622 = vmatpush1.msra.mxu0 %v368
        %623 = vmatprep.subr.mxu0 %v376
        %624 = vmatpush1.msra.mxu0 %v375
        %625 = vmatprep.subr.mxu0 %v383
        %626 = vmatpush1.msra.mxu0 %v382
        %627 = vmatprep.subr.mxu0 %v390
        %628 = vmatpush1.msra.mxu0 %v389
        %629 = vmatprep.subr.mxu0 %v397
        %630 = vmatpush1.msra.mxu0 %v396
        %631 = vmatprep.subr.mxu0 %v404
        %632 = vmatpush1.msra.mxu0 %v403
        %633 = vmatprep.subr.mxu0 %v411
        %634 = vmatpush1.msra.mxu0 %v410
        %635 = vmatprep.subr.mxu0 %v418
        %636 = vmatpush1.msra.mxu0 %v417
        %637 = vmatprep.subr.mxu0 %v425
        %638 = vmatpush1.msra.mxu0 %v424
        %639 = vmatprep.subr.mxu0 %v432
        %640 = vmatpush1.msra.mxu0 %v431
        %641 = vmatprep.subr.mxu0 %v439
        %642 = vmatpush1.msra.mxu0 %v438
        %643 = vmatprep.subr.mxu0 %v446
        %644 = vmatpush1.msra.mxu0 %v445
        %645 = vmatprep.subr.mxu0 %v453
        %646 = vmatpush1.msra.mxu0 %v452
        %647 = vmatprep.subr.mxu0 %v460
        %648 = vmatpush1.msra.mxu0 %v459
        %649 = vmatprep.subr.mxu0 %v467
        %650 = vmatpush1.msra.mxu0 %v466
        %651 = vmatprep.subr.mxu0 %v474
        %652 = vmatpush1.msra.mxu0 %v473
        %653 = vmatprep.subr.mxu0 %v481
        %654 = vmatpush1.msra.mxu0 %v480
        %655 = vmatprep.subr.mxu0 %v488
        %656 = vmatpush1.msra.mxu0 %v487
        %657 = vmatprep.subr.mxu0 %v495
        %658 = vmatpush1.msra.mxu0 %v494
        %659 = vmatprep.subr.mxu0 %v502
        %660 = vmatpush1.msra.mxu0 %v501
        %661 = vmatprep.subr.mxu0 %v509
        %662 = vmatpush1.msra.mxu0 %v508
        %663 = vmatprep.subr.mxu0 %v516
        %664 = vmatpush1.msra.mxu0 %v515
        %665 = vmatprep.subr.mxu0 %v523
        %666 = vmatpush1.msra.mxu0 %v522
        %667 = vmatprep.subr.mxu0 %v530
        %668 = vmatpush1.msra.mxu0 %v529
        %669 = vmatprep.mubr.f32.mxu0 %v308
        %670 = vmatmul.mubr.f32.gmra.mrb[0].mxu0 %v306
        %v671 = vpop.f32.mrb[0].mxu0
        %v672 = vadd.f32 0.0, %v671
        %v673 = vpop.f32.mrb[0].mxu0
        %v674 = vadd.f32 0.0, %v673
        %675 = vdwg.mxu0
        %676 = vmatprep.subr.mxu0 %v315
        %677 = vmatpush1.msra.mxu0 %v314
        %678 = vmatprep.subr.mxu0 %v322
        %679 = vmatpush1.msra.mxu0 %v321
        %680 = vmatprep.subr.mxu0 %v329
        %681 = vmatpush1.msra.mxu0 %v328
        %682 = vmatprep.subr.mxu0 %v336
        %683 = vmatpush1.msra.mxu0 %v335
        %684 = vmatprep.subr.mxu0 %v343
        %685 = vmatpush1.msra.mxu0 %v342
        %686 = vmatprep.subr.mxu0 %v350
        %687 = vmatpush1.msra.mxu0 %v349
        %688 = vmatprep.subr.mxu0 %v357
        %689 = vmatpush1.msra.mxu0 %v356
        %690 = vmatprep.subr.mxu0 %v364
        %691 = vmatpush1.msra.mxu0 %v363
        %692 = vmatprep.subr.mxu0 %v371
        %693 = vmatpush1.msra.mxu0 %v370
        %694 = vmatprep.subr.mxu0 %v378
        %695 = vmatpush1.msra.mxu0 %v377
        %696 = vmatprep.subr.mxu0 %v385
        %697 = vmatpush1.msra.mxu0 %v384
        %698 = vmatprep.subr.mxu0 %v392
        %699 = vmatpush1.msra.mxu0 %v391
        %700 = vmatprep.subr.mxu0 %v399
        %701 = vmatpush1.msra.mxu0 %v398
        %702 = vmatprep.subr.mxu0 %v406
        %703 = vmatpush1.msra.mxu0 %v405
        %704 = vmatprep.subr.mxu0 %v413
        %705 = vmatpush1.msra.mxu0 %v412
        %706 = vmatprep.subr.mxu0 %v420
        %707 = vmatpush1.msra.mxu0 %v419
        %708 = vmatprep.subr.mxu0 %v427
        %709 = vmatpush1.msra.mxu0 %v426
        %710 = vmatprep.subr.mxu0 %v434
        %711 = vmatpush1.msra.mxu0 %v433
        %712 = vmatprep.subr.mxu0 %v441
        %713 = vmatpush1.msra.mxu0 %v440
        %714 = vmatprep.subr.mxu0 %v448
        %715 = vmatpush1.msra.mxu0 %v447
        %716 = vmatprep.subr.mxu0 %v455
        %717 = vmatpush1.msra.mxu0 %v454
        %718 = vmatprep.subr.mxu0 %v462
        %719 = vmatpush1.msra.mxu0 %v461
        %720 = vmatprep.subr.mxu0 %v469
        %721 = vmatpush1.msra.mxu0 %v468
        %722 = vmatprep.subr.mxu0 %v476
        %723 = vmatpush1.msra.mxu0 %v475
        %724 = vmatprep.subr.mxu0 %v483
        %725 = vmatpush1.msra.mxu0 %v482
        %726 = vmatprep.subr.mxu0 %v490
        %727 = vmatpush1.msra.mxu0 %v489
        %728 = vmatprep.subr.mxu0 %v497
        %729 = vmatpush1.msra.mxu0 %v496
        %730 = vmatprep.subr.mxu0 %v504
        %731 = vmatpush1.msra.mxu0 %v503
        %732 = vmatprep.subr.mxu0 %v511
        %733 = vmatpush1.msra.mxu0 %v510
        %734 = vmatprep.subr.mxu0 %v518
        %735 = vmatpush1.msra.mxu0 %v517
        %736 = vmatprep.subr.mxu0 %v525
        %737 = vmatpush1.msra.mxu0 %v524
        %738 = vmatprep.subr.mxu0 %v532
        %739 = vmatpush1.msra.mxu0 %v531
        %740 = vmatprep.mubr.f32.mxu0 %v308
        %741 = vmatmul.mubr.f32.gmra.mrb[0].mxu0 %v306
        %v742 = vpop.f32.mrb[0].mxu0
        %v743 = vadd.f32 0.0, %v742
        %v744 = vpop.f32.mrb[0].mxu0
        %v745 = vadd.f32 0.0, %v744
        %746 = vdwg.mxu0
        %747 = vmatprep.subr.mxu0 0.0
        %748 = vmatpush1.msra.mxu0 %v316
        %749 = vmatprep.subr.mxu0 0.0
        %750 = vmatpush1.msra.mxu0 %v323
        %751 = vmatprep.subr.mxu0 0.0
        %752 = vmatpush1.msra.mxu0 %v330
        %753 = vmatprep.subr.mxu0 0.0
        %754 = vmatpush1.msra.mxu0 %v337
        %755 = vmatprep.subr.mxu0 0.0
        %756 = vmatpush1.msra.mxu0 %v344
        %757 = vmatprep.subr.mxu0 0.0
        %758 = vmatpush1.msra.mxu0 %v351
        %759 = vmatprep.subr.mxu0 0.0
        %760 = vmatpush1.msra.mxu0 %v358
        %761 = vmatprep.subr.mxu0 0.0
        %762 = vmatpush1.msra.mxu0 %v365
        %763 = vmatprep.subr.mxu0 0.0
        %764 = vmatpush1.msra.mxu0 %v372
        %765 = vmatprep.subr.mxu0 0.0
        %766 = vmatpush1.msra.mxu0 %v379
        %767 = vmatprep.subr.mxu0 0.0
        %768 = vmatpush1.msra.mxu0 %v386
        %769 = vmatprep.subr.mxu0 0.0
        %770 = vmatpush1.msra.mxu0 %v393
        %771 = vmatprep.subr.mxu0 0.0
        %772 = vmatpush1.msra.mxu0 %v400
        %773 = vmatprep.subr.mxu0 0.0
        %774 = vmatpush1.msra.mxu0 %v407
        %775 = vmatprep.subr.mxu0 0.0
        %776 = vmatpush1.msra.mxu0 %v414
        %777 = vmatprep.subr.mxu0 0.0
        %778 = vmatpush1.msra.mxu0 %v421
        %779 = vmatprep.subr.mxu0 0.0
        %780 = vmatpush1.msra.mxu0 %v428
        %781 = vmatprep.subr.mxu0 0.0
        %782 = vmatpush1.msra.mxu0 %v435
        %783 = vmatprep.subr.mxu0 0.0
        %784 = vmatpush1.msra.mxu0 %v442
        %785 = vmatprep.subr.mxu0 0.0
        %786 = vmatpush1.msra.mxu0 %v449
        %787 = vmatprep.subr.mxu0 0.0
        %788 = vmatpush1.msra.mxu0 %v456
        %789 = vmatprep.subr.mxu0 0.0
        %790 = vmatpush1.msra.mxu0 %v463
        %791 = vmatprep.subr.mxu0 0.0
        %792 = vmatpush1.msra.mxu0 %v470
        %793 = vmatprep.subr.mxu0 0.0
        %794 = vmatpush1.msra.mxu0 %v477
        %795 = vmatprep.subr.mxu0 0.0
        %796 = vmatpush1.msra.mxu0 %v484
        %797 = vmatprep.subr.mxu0 0.0
        %798 = vmatpush1.msra.mxu0 %v491
        %799 = vmatprep.subr.mxu0 0.0
        %800 = vmatpush1.msra.mxu0 %v498
        %801 = vmatprep.subr.mxu0 0.0
        %802 = vmatpush1.msra.mxu0 %v505
        %803 = vmatprep.subr.mxu0 0.0
        %804 = vmatpush1.msra.mxu0 %v512
        %805 = vmatprep.subr.mxu0 0.0
        %806 = vmatpush1.msra.mxu0 %v519
        %807 = vmatprep.subr.mxu0 0.0
        %808 = vmatpush1.msra.mxu0 %v526
        %809 = vmatprep.subr.mxu0 0.0
        %810 = vmatpush1.msra.mxu0 %v533
        %811 = vmatprep.mubr.f32.mxu0 %v308
        %812 = vmatmul.mubr.f32.gmra.mrb[0].mxu0 %v306
        %v813 = vpop.f32.mrb[0].mxu0
        %v814 = vadd.f32 0.0, %v813
        %v815 = vpop.f32.mrb[0].mxu0
        %816 = vdwg.mxu0
        %v817 = vmax.f32 %v601, 0.0
        %v818 = vmax.f32 %v603, 0.0
        %v819 = vmax.f32 %v672, 0.0
        %v820 = vmax.f32 %v674, 0.0
        %v821 = vmax.f32 %v743, 0.0
        %v822 = vmax.f32 %v745, 0.0
        %v823 = vmax.f32 %v814, 0.0
        %v824 = vmul.f32 %v817, 1.442695
        %v825 = vpow.pop %v824
        %v826 = vmul.f32 %v818, 1.442695
        %v827 = vpow.pop %v826
        %v828 = vmul.f32 %v819, 1.442695
        %v829 = vpow.pop %v828
        %v830 = vmul.f32 %v820, 1.442695
        %v831 = vpow.pop %v830
        %v832 = vmul.f32 %v821, 1.442695
        %v833 = vpow.pop %v832
        %v834 = vmul.f32 %v822, 1.442695
        %v835 = vpow.pop %v834
        %v836 = vmul.f32 %v823, 1.442695
        %v837 = vpow.pop %v836
        %v838 = vadd.f32 %v825, %v827
        %v839 = vadd.f32 %v838, %v829
        %v840 = vadd.f32 %v839, %v831
        %v841 = vadd.f32 %v840, %v833
        %v842 = vadd.f32 %v841, %v835
        %v843 = vadd.f32 %v842, %v837
        %844 = vadd.xlane.f32.xlu0 %v843
        %v845 = vpop.xlane.xlu0 %844
        %v846 = vsub.f32 %v845, 112.0
        %v847 = vrcp.pop %v846
        %v848 = vmul.f32 %v847, 10.0
        %v849 = vmul.f32 %v817, %v848
        %v850 = vmul.f32 %v818, %v848
        %v851 = vmul.f32 %v819, %v848
        %v852 = vmul.f32 %v820, %v848
        %v853 = vmul.f32 %v821, %v848
        %v854 = vmul.f32 %v822, %v848
        %v855 = vmul.f32 %v823, %v848
        %856 = vst [vmem:[%s213] sm:$0xff] %v849
        %857 = vst [vmem:[%s213 + $0x8] sm:$0xff] %v850
        %858 = vst [vmem:[%s213 + $0x10] sm:$0xff] %v851
        %859 = vst [vmem:[%s213 + $0x18] sm:$0xff] %v852
        %860 = vst [vmem:[%s213 + $0x20] sm:$0xff] %v853
        %861 = vst [vmem:[%s213 + $0x28] sm:$0xff] %v854
        %862 = vst [vmem:[%s213 + $0x30] sm:$0xff] %v855
        %s863 = sand.u32 %s115, 1
        %s864 = scalar_lea.sflag [#allocation4], %s863
        %s865 = sand.u32 %s115, 1
        %s866 = smul.addr %s865, 56
        %s867 = scalar_lea.vmem [#allocation5], %s866
        // Predicated region
        $region37: #{tpu_custom_call.1} parent=31 // pred_check
          %p868 = pneg %p125
        $region38: #{tpu_custom_call.1} parent=31 // pred_check_branch
          %870 = sbr.rel (%p868) target = $region40
        $region39: #{tpu_custom_call.1} parent=31 // pred_region
          %s872 = ssub.s32 896, 896
          %873 = vsyncadd %s864, %s872
          %s874 = smul.addr %s23, 7
          %s875 = smul.addr %s22, 7
          %s876 = sadd.s32 %s874, %s875
          %s877 = smul.addr %s876, 128
          %s878 = scalar_lea.hbm %s3, %s877
          %s880 = sshll.u32 %s867, 4
          %s881 = int_to_ptr.vmem [resolvable:$true] %s880
          %883 = dma.vmem_to_hbm [thread:$0]  %s881, 896, %s878, %s864
        $region40: #{tpu_custom_call.1} parent=31 // pred_fallthru
          _
      $region32: #{tpu_custom_call.1} parent=5 // pred_fallthru
        _
      %p884 = scmp.le.s32.totalorder 2, %s13
      // Predicated region
      $region41: #{tpu_custom_call.1} parent=5 // pred_check
        %p885 = pneg %p884
      $region42: #{tpu_custom_call.1} parent=5 // pred_check_branch
        %887 = sbr.rel (%p885) target = $region44
      $region43: #{tpu_custom_call.1} parent=5 // pred_region
        %s888 = ssub.s32 %s13, 2
        // Predicated region
        $region45: #{tpu_custom_call.1} parent=43 // pred_check
          %p889 = pneg %p131
        $region46: #{tpu_custom_call.1} parent=43 // pred_check_branch
          %891 = sbr.rel (%p889) target = $region48
        $region47: #{tpu_custom_call.1} parent=43 // pred_region
          %s892 = sand.u32 %s116, 1
          %s893 = scalar_lea.sflag [#allocation4], %s892
          %s894 = sand.u32 %s116, 1
          %s895 = smul.addr %s894, 56
          %s896 = scalar_lea.vmem [#allocation5], %s895
          %897 = dma.done %s893, 896
        $region48: #{tpu_custom_call.1} parent=43 // pred_fallthru
          _
      $region44: #{tpu_custom_call.1} parent=5 // pred_fallthru
        _
    $region6: #{tpu_custom_call.1} parent=1 // loop_footer
      %s17 = sadd.s32 1, %s13
    $region7: #{tpu_custom_call.1} parent=1 // loop_footer_branch
      %12 = sbr.rel target = $region3
    $region8: #{tpu_custom_call.1} parent=1 // loop_exit
      _
    %898 = vsyncpa [#allocation3], 1
    %s899 = scalar_lea.sflag [#allocation3], 1
    %900 = vsyncpa %s899, 1
    %901 = vsyncpa [#allocation4], 1
    %s902 = scalar_lea.sflag [#allocation4], 1
    %903 = vsyncpa %s902, 1

</llo_original>
